<compile_context>
chip_gen: v7x
topology: tpu7x:2x2x1
jax: 0.10.0
libtpu: 0.0.40
codegen_flags: <defaults>
</compile_context>

<pallas_src>
import functools

import jax
import jax.numpy as jnp
from jax.experimental import pallas as pl
from jax.experimental.pallas import tpu as pltpu


def _discriminator_kernel(intention_dim,
                          xt_ref,
                          w1_ref, b1_ref, w2_ref, b2_ref, w3_ref, b3_ref,
                          out_ref):
    """Fused, activation-transposed forward for both discriminators.

    xt_ref : (D_tot, TB)   transposed input tile (D_tot = I + S + A)
    w1     : (2H, D_tot)   zero columns for the I intention features
    b1     : (2H, 1)
    w2     : (2H, 2H)      block-diagonal
    b2     : (2H, 1)
    w3     : (2, 2H)       row 0 -> disc1 head, row 1 -> disc2 head
    b3     : (2, 1)
    out    : (1, TB)       lane-dense output block
    """
    xt = xt_ref[...].astype(jnp.float32)                      # (D_tot, TB)

    h1 = jnp.tanh(jnp.dot(w1_ref[...], xt,
                          preferred_element_type=jnp.float32) + b1_ref[...])
    h2 = jnp.tanh(jnp.dot(w2_ref[...], h1,
                          preferred_element_type=jnp.float32) + b2_ref[...])
    d = jax.nn.sigmoid(jnp.dot(w3_ref[...], h2,
                               preferred_element_type=jnp.float32)
                       + b3_ref[...])                          # (2, TB)

    # out[b] = x[b, 0] * d1[b] + x[b, 1] * d2[b]  (sublane slice + 2-row sum)
    intention = xt[:intention_dim, :]                          # (2, TB)
    out_ref[...] = jnp.sum(intention * d, axis=0,
                           keepdims=True).astype(out_ref.dtype)


def _num_tensorcores_per_chip():
    """Best-effort TC-per-chip detection (perf-only; correctness unaffected)."""
    try:
        kind = jax.devices()[0].device_kind.lower()
    except Exception:  # pragma: no cover - non-TPU / odd backends
        return 1
    if "v7" in kind or "tpu7" in kind:   # v7x: 2 TensorCores per chip
        return 2
    return 1                             # v5e / v6e: 1 TensorCore per chip


def _round_up(v, m):
    return ((v + m - 1) // m) * m


def _pick_batch_tile(B, batch_tile, num_cores):
    """Pick a batch-tile (lane) width.

    Constraints: TB == B (single block) or TB a multiple of 128 (so the
    lane-dense blocks satisfy the (8,128) BlockSpec rule; partial edge block
    is handled by the cdiv grid with masked stores).
    """
    cap = max(128, (batch_tile // 128) * 128)
    if num_cores <= 1:
        # v5e/v6e: the grid is a serial loop on one TC -> one big tile.
        return B if B <= cap else cap
    # v7x: aim for an even number of similarly sized blocks so both
    # TensorCores get balanced work via dimension_semantics=("parallel",).
    if B <= 256:
        return B
    k = 1
    while _round_up(pl.cdiv(B, 2 * k), 128) > cap:
        k += 1
    return _round_up(pl.cdiv(B, 2 * k), 128)


def discriminator_forward(x, fused_params, *, intention_dim, state_dim,
                          action_dim, batch_tile=8192):
    """Pallas wrapper. x: (B, I+S+A) or (I+S+A,). fused_params: 6 fused arrays."""
    sq = x.ndim == 1
    if sq:
        x = x[None, :]
    B, D_tot = x.shape
    input_dim = state_dim + action_dim
    assert D_tot == intention_dim + input_dim
    assert intention_dim == 2, "torch broadcast in forward requires intention_dim == 2"

    # Layout plumbing (XLA, outside the kernel): present x transposed so the
    # kernel's activations / output are lane-dense. (B, D_tot) -> (D_tot, B).
    xt = x.astype(jnp.float32).T

    TB = _pick_batch_tile(B, batch_tile, _num_tensorcores_per_chip())
    grid = (pl.cdiv(B, TB),)   # partial edge block handled by Pallas

    # Fused weights / biases: whole array resident every grid step.
    def full_spec(p):
        zeros = (0,) * p.ndim
        return pl.BlockSpec(p.shape, lambda i, z=zeros: z)

    param_specs = [full_spec(p) for p in fused_params]

    kernel = functools.partial(_discriminator_kernel, intention_dim)

    out = pl.pallas_call(
        kernel,
        out_shape=jax.ShapeDtypeStruct((1, B), jnp.float32),
        grid_spec=pltpu.PrefetchScalarGridSpec(
            num_scalar_prefetch=0,
            grid=grid,
            in_specs=[pl.BlockSpec((D_tot, TB), lambda i: (0, i))] + param_specs,
            out_specs=pl.BlockSpec((1, TB), lambda i: (0, i)),
        ),
        compiler_params=pltpu.CompilerParams(
            dimension_semantics=("parallel",),
            vmem_limit_bytes=32 * 1024 * 1024,
        ),
    )(xt, *fused_params)

    out = out.reshape(B, 1)   # (1, B) -> (B, 1): row-major reshape, no data reorder
    if sq:
        out = out[0]
    return out


def init_params(key, state_dim, action_dim, hidden_dim):
    """Deterministic init mimicking nn.Linear default (U[-1/sqrt(fan_in), +...]).
    Weights stored in PyTorch orientation (out_features, in_features); biases
    as (out_features,). Returns 12 raw params (disc1 then disc2)."""
    in_dim = state_dim + action_dim
    dims = [(hidden_dim, in_dim), (hidden_dim, hidden_dim), (1, hidden_dim)]
    params = []
    for _ in range(2):  # disc1, disc2
        for (fo, fi) in dims:
            key, kw, kb = jax.random.split(key, 3)
            bound = 1.0 / jnp.sqrt(fi)
            w = jax.random.uniform(kw, (fo, fi), jnp.float32, -bound, bound)
            b = jax.random.uniform(kb, (fo,), jnp.float32, -bound, bound)
            params.extend([w, b])
    # NOTE: self.log_std is a parameter of the module but unused in forward.
    return params


def fuse_params(raw_params, intention_dim):
    """Fuse the two 3-layer MLPs into one width-2H transposed-layout MLP.

    W1 gains `intention_dim` exact-zero leading columns so the kernel can
    contract over the full D_tot input axis (no in-kernel lane slice)."""
    (w1a, b1a, w2a, b2a, w3a, b3a,
     w1b, b1b, w2b, b2b, w3b, b3b) = raw_params
    H, in_dim = w1a.shape
    D_tot = intention_dim + in_dim

    w1t = jnp.zeros((2 * H, D_tot), jnp.float32)
    w1t = w1t.at[:H, intention_dim:].set(w1a).at[H:, intention_dim:].set(w1b)
    b1t = jnp.concatenate([b1a, b1b])[:, None]                 # (2H, 1)

    w2t = jnp.zeros((2 * H, 2 * H), jnp.float32)
    w2t = w2t.at[:H, :H].set(w2a).at[H:, H:].set(w2b)          # block-diag
    b2t = jnp.concatenate([b2a, b2b])[:, None]                 # (2H, 1)

    w3t = jnp.zeros((2, 2 * H), jnp.float32)
    w3t = w3t.at[0:1, :H].set(w3a).at[1:2, H:].set(w3b)        # block rows
    b3t = jnp.concatenate([b3a, b3b])[:, None]                 # (2, 1)
    return [w1t, b1t, w2t, b2t, w3t, b3t]


def reference_forward(x, raw_params, *, intention_dim, state_dim, action_dim):
    """Pure-JAX reference of the PyTorch forward for validation (unfused)."""
    sq = x.ndim == 1
    if sq:
        x = x[None, :]
    I = intention_dim
    sa = x[:, I:I + state_dim + action_dim]
    intention = x[:, :I]

    def mlp(sa, p):
        w1, b1, w2, b2, w3, b3 = p
        h = jnp.tanh(sa @ w1.T + b1)
        h = jnp.tanh(h @ w2.T + b2)
        return jax.nn.sigmoid(h @ w3.T + b3)

    d1 = mlp(sa, raw_params[0:6])
    d2 = mlp(sa, raw_params[6:12])
    out = intention[:, 0:1] * d1 + intention[:, 1:2] * d2
    if sq:
        out = out[0]
    return out


if __name__ == "__main__":
    intention_dim = 2      # number of discriminators (required by forward's broadcast)
    state_dim = 6
    action_dim = 2
    hidden_dim = 32

    key = jax.random.PRNGKey(0)
    kx, kp, kx2 = jax.random.split(key, 3)
    raw_params = init_params(kp, state_dim, action_dim, hidden_dim)
    fused_params = fuse_params(raw_params, intention_dim)

    D_tot = intention_dim + state_dim + action_dim

    # Small batch (single block).
    batch = 8
    x = jax.random.normal(kx, (batch, D_tot), jnp.float32)
    out = discriminator_forward(x, fused_params,
                                intention_dim=intention_dim,
                                state_dim=state_dim,
                                action_dim=action_dim)
    out = jax.block_until_ready(out)
    ref = reference_forward(x, raw_params,
                            intention_dim=intention_dim,
                            state_dim=state_dim,
                            action_dim=action_dim)
    assert out.shape == (batch, 1), out.shape
    assert jnp.allclose(out, ref, atol=1e-5, rtol=1e-5), (out, ref)

    # Larger, non-divisible batch: exercises cdiv grid + partial edge block
    # (or a single full block on 1-TC chips).
    batch2 = 300
    x2 = jax.random.normal(kx2, (batch2, D_tot), jnp.float32)
    out2 = jax.block_until_ready(
        discriminator_forward(x2, fused_params,
                              intention_dim=intention_dim,
                              state_dim=state_dim,
                              action_dim=action_dim))
    ref2 = reference_forward(x2, raw_params,
                             intention_dim=intention_dim,
                             state_dim=state_dim,
                             action_dim=action_dim)
    assert out2.shape == (batch2, 1), out2.shape
    assert jnp.allclose(out2, ref2, atol=1e-5, rtol=1e-5)

    # 1-D input path (torch's `sq` branch).
    out1d = jax.block_until_ready(
        discriminator_forward(x[0], fused_params,
                              intention_dim=intention_dim,
                              state_dim=state_dim,
                              action_dim=action_dim))
    assert out1d.shape == (1,), out1d.shape
    assert jnp.allclose(out1d, ref[0], atol=1e-5, rtol=1e-5)

    print("KERNEL_OK")
</pallas_src>

<mosaic_0001>
module attributes {stable_mosaic.version = 11 : i64} {
  func.func @_discriminator_kernel(%arg0: i32, %arg1: memref<10x8xf32, #tpu.memory_space<vmem>>, %arg2: memref<64x10xf32, #tpu.memory_space<vmem>>, %arg3: memref<64x1xf32, #tpu.memory_space<vmem>>, %arg4: memref<64x64xf32, #tpu.memory_space<vmem>>, %arg5: memref<64x1xf32, #tpu.memory_space<vmem>>, %arg6: memref<2x64xf32, #tpu.memory_space<vmem>>, %arg7: memref<2x1xf32, #tpu.memory_space<vmem>>, %arg8: memref<1x8xf32, #tpu.memory_space<vmem>>) attributes {dimension_semantics = [#tpu.dimension_semantics<parallel>], iteration_bounds = array<i64: 1>, scalar_prefetch = 0 : i64, scratch_operands = 0 : i64, tpu.core_type = #tpu.core_type<tc>, window_params = [{transform_indices = @transform_0, window_bounds = array<i64: 10, 8>}, {pipeline_mode = #tpu.pipeline_mode<synchronous>, transform_indices = @transform_1, window_bounds = array<i64: 64, 10>}, {pipeline_mode = #tpu.pipeline_mode<synchronous>, transform_indices = @transform_2, window_bounds = array<i64: 64, 1>}, {pipeline_mode = #tpu.pipeline_mode<synchronous>, transform_indices = @transform_3, window_bounds = array<i64: 64, 64>}, {pipeline_mode = #tpu.pipeline_mode<synchronous>, transform_indices = @transform_4, window_bounds = array<i64: 64, 1>}, {pipeline_mode = #tpu.pipeline_mode<synchronous>, transform_indices = @transform_5, window_bounds = array<i64: 2, 64>}, {pipeline_mode = #tpu.pipeline_mode<synchronous>, transform_indices = @transform_6, window_bounds = array<i64: 2, 1>}, {transform_indices = @transform_7, window_bounds = array<i64: 1, 8>}]} {
    %c0 = arith.constant 0 : index
    %c0_0 = arith.constant 0 : index
    %0 = vector.load %arg1[%c0, %c0_0] : memref<10x8xf32, #tpu.memory_space<vmem>>, vector<10x8xf32>
    %c0_1 = arith.constant 0 : index
    %c0_2 = arith.constant 0 : index
    %1 = vector.load %arg2[%c0_1, %c0_2] : memref<64x10xf32, #tpu.memory_space<vmem>>, vector<64x10xf32>
    %cst = arith.constant dense<0.000000e+00> : vector<64x8xf32>
    %2 = tpu.matmul %1, %0, %cst {dimension_numbers = #tpu.dot_dimension_numbers<[1], [0], [0], [1], [0, 0, 1, 1], [], []>} : vector<64x10xf32>, vector<10x8xf32>, vector<64x8xf32> -> vector<64x8xf32>
    %c0_3 = arith.constant 0 : index
    %c0_4 = arith.constant 0 : index
    %3 = vector.load %arg3[%c0_3, %c0_4] : memref<64x1xf32, #tpu.memory_space<vmem>>, vector<64x1xf32>
    %4 = vector.broadcast %3 : vector<64x1xf32> to vector<64x8xf32>
    %5 = arith.addf %2, %4 : vector<64x8xf32>
    %6 = math.tanh %5 : vector<64x8xf32>
    %c0_5 = arith.constant 0 : index
    %c0_6 = arith.constant 0 : index
    %7 = vector.load %arg4[%c0_5, %c0_6] : memref<64x64xf32, #tpu.memory_space<vmem>>, vector<64x64xf32>
    %cst_7 = arith.constant dense<0.000000e+00> : vector<64x8xf32>
    %8 = tpu.matmul %7, %6, %cst_7 {dimension_numbers = #tpu.dot_dimension_numbers<[1], [0], [0], [1], [0, 0, 1, 1], [], []>} : vector<64x64xf32>, vector<64x8xf32>, vector<64x8xf32> -> vector<64x8xf32>
    %c0_8 = arith.constant 0 : index
    %c0_9 = arith.constant 0 : index
    %9 = vector.load %arg5[%c0_8, %c0_9] : memref<64x1xf32, #tpu.memory_space<vmem>>, vector<64x1xf32>
    %10 = vector.broadcast %9 : vector<64x1xf32> to vector<64x8xf32>
    %11 = arith.addf %8, %10 : vector<64x8xf32>
    %12 = math.tanh %11 : vector<64x8xf32>
    %c0_10 = arith.constant 0 : index
    %c0_11 = arith.constant 0 : index
    %13 = vector.load %arg6[%c0_10, %c0_11] : memref<2x64xf32, #tpu.memory_space<vmem>>, vector<2x64xf32>
    %cst_12 = arith.constant dense<0.000000e+00> : vector<2x8xf32>
    %14 = tpu.matmul %13, %12, %cst_12 {dimension_numbers = #tpu.dot_dimension_numbers<[1], [0], [0], [1], [0, 0, 1, 1], [], []>} : vector<2x64xf32>, vector<64x8xf32>, vector<2x8xf32> -> vector<2x8xf32>
    %c0_13 = arith.constant 0 : index
    %c0_14 = arith.constant 0 : index
    %15 = vector.load %arg7[%c0_13, %c0_14] : memref<2x1xf32, #tpu.memory_space<vmem>>, vector<2x1xf32>
    %16 = vector.broadcast %15 : vector<2x1xf32> to vector<2x8xf32>
    %17 = arith.addf %14, %16 : vector<2x8xf32>
    %18 = arith.negf %17 : vector<2x8xf32>
    %19 = math.exp %18 : vector<2x8xf32>
    %cst_15 = arith.constant 1.000000e+00 : f32
    %20 = vector.broadcast %cst_15 : f32 to vector<2x8xf32>
    %21 = arith.addf %20, %19 : vector<2x8xf32>
    %22 = arith.divf %20, %21 : vector<2x8xf32>
    %23 = vector.extract_strided_slice %0 {offsets = [0, 0], sizes = [2, 8], strides = [1, 1]} : vector<10x8xf32> to vector<2x8xf32>
    %24 = arith.mulf %23, %22 : vector<2x8xf32>
    %cst_16 = arith.constant dense<0.000000e+00> : vector<8xf32>
    %25 = vector.multi_reduction <add>, %24, %cst_16 [0] : vector<2x8xf32> to vector<8xf32>
    %26 = vector.shape_cast %25 : vector<8xf32> to vector<1x8xf32>
    %c0_17 = arith.constant 0 : index
    %c0_18 = arith.constant 0 : index
    %27 = vector.load %arg8[%c0_17, %c0_18] : memref<1x8xf32, #tpu.memory_space<vmem>>, vector<1x8xf32>
    tpu.vector_store %arg8[%c0_17, %c0_18], %26 {strides = array<i32>} : memref<1x8xf32, #tpu.memory_space<vmem>>, vector<1x8xf32>,
    return
  }
  func.func @transform_0(%arg0: i32) -> (i32, i32) {
    %c0_i32 = arith.constant 0 : i32
    %c0_i32_0 = arith.constant 0 : i32
    return %c0_i32, %arg0 : i32, i32
  }
  func.func @transform_1(%arg0: i32) -> (i32, i32) {
    %c0_i32 = arith.constant 0 : i32
    %c0_i32_0 = arith.constant 0 : i32
    %c0_i32_1 = arith.constant 0 : i32
    return %c0_i32, %c0_i32_0 : i32, i32
  }
  func.func @transform_2(%arg0: i32) -> (i32, i32) {
    %c0_i32 = arith.constant 0 : i32
    %c0_i32_0 = arith.constant 0 : i32
    %c0_i32_1 = arith.constant 0 : i32
    return %c0_i32, %c0_i32_0 : i32, i32
  }
  func.func @transform_3(%arg0: i32) -> (i32, i32) {
    %c0_i32 = arith.constant 0 : i32
    %c0_i32_0 = arith.constant 0 : i32
    %c0_i32_1 = arith.constant 0 : i32
    return %c0_i32, %c0_i32_0 : i32, i32
  }
  func.func @transform_4(%arg0: i32) -> (i32, i32) {
    %c0_i32 = arith.constant 0 : i32
    %c0_i32_0 = arith.constant 0 : i32
    %c0_i32_1 = arith.constant 0 : i32
    return %c0_i32, %c0_i32_0 : i32, i32
  }
  func.func @transform_5(%arg0: i32) -> (i32, i32) {
    %c0_i32 = arith.constant 0 : i32
    %c0_i32_0 = arith.constant 0 : i32
    %c0_i32_1 = arith.constant 0 : i32
    return %c0_i32, %c0_i32_0 : i32, i32
  }
  func.func @transform_6(%arg0: i32) -> (i32, i32) {
    %c0_i32 = arith.constant 0 : i32
    %c0_i32_0 = arith.constant 0 : i32
    %c0_i32_1 = arith.constant 0 : i32
    return %c0_i32, %c0_i32_0 : i32, i32
  }
  func.func @transform_7(%arg0: i32) -> (i32, i32) {
    %c0_i32 = arith.constant 0 : i32
    %c0_i32_0 = arith.constant 0 : i32
    return %c0_i32, %arg0 : i32, i32
  }
}

</mosaic_0001>

<llo_original>
// kernel: tpu_custom_call.1
$region0: #{tpu_custom_call.1}
  #allocation0 [shape = 'u32[]', space=smem, size = 0x4, offset = 0x4, fixed_abs, tag = 'smem constant byte address 0x4 - core index']
  #allocation1 [shape = 'u32[144,128]{1,0:T(1,128)}', space=vmem, size = 0x12000, scoped, tag = 'internal scratch']
  %s0 = inlined_call_operand.vmem [shape: f32[10,8], index: 0, kind: input, shape index: {}]
  %s1 = inlined_call_operand.vmem [shape: f32[64,10], index: 1, kind: input, shape index: {}]
  %s2 = inlined_call_operand.vmem [shape: f32[64,1], index: 2, kind: input, shape index: {}]
  %s3 = inlined_call_operand.vmem [shape: f32[64,64], index: 3, kind: input, shape index: {}]
  %s4 = inlined_call_operand.vmem [shape: f32[64,1], index: 4, kind: input, shape index: {}]
  %s5 = inlined_call_operand.vmem [shape: f32[2,64], index: 5, kind: input, shape index: {}]
  %s6 = inlined_call_operand.vmem [shape: f32[2,1], index: 6, kind: input, shape index: {}]
  %s7 = inlined_call_operand.hbm [shape: f32[1,8], index: 7, kind: output, shape index: {}]
  %s8 = sld [smem:[#allocation0]]
  $region38: #{tpu_custom_call.1} parent=0
    _
  %s10 = ssub.s32 1, %s8
  %s11 = scalar_select 0, %s10, %s8
  $region1: #{tpu_custom_call.1} parent=0
    #allocation2 [shape = 'u8[512]{0}', space=vmem, size = 0x400, scoped, tag = 'output window, operand 0, single buffered']
    #allocation3 [shape = 's32[1]{0}', space=sflag, size = 0x4, scoped, tag = 'scoped memory for tpu_custom_call.1']
    %12 = vsyncpa [#allocation3], 0
    // Predicated region
    $region2: #{tpu_custom_call.1} parent=1 // pred_check
      _
    $region3: #{tpu_custom_call.1} parent=1 // pred_check_branch
      %14 = sbr.rel (0) target = $region5
    $region4: #{tpu_custom_call.1} parent=1 // pred_region
      _
    $region5: #{tpu_custom_call.1} parent=1 // pred_fallthru
      _
    // Predicated region
    $region6: #{tpu_custom_call.1} parent=1 // pred_check
      _
    $region7: #{tpu_custom_call.1} parent=1 // pred_check_branch
      %16 = sbr.rel (0) target = $region9
    $region8: #{tpu_custom_call.1} parent=1 // pred_region
      _
    $region9: #{tpu_custom_call.1} parent=1 // pred_fallthru
      _
    // Predicated region
    $region10: #{tpu_custom_call.1} parent=1 // pred_check
      _
    $region11: #{tpu_custom_call.1} parent=1 // pred_check_branch
      %18 = sbr.rel (0) target = $region13
    $region12: #{tpu_custom_call.1} parent=1 // pred_region
      _
    $region13: #{tpu_custom_call.1} parent=1 // pred_fallthru
      _
    // Predicated region
    $region14: #{tpu_custom_call.1} parent=1 // pred_check
      _
    $region15: #{tpu_custom_call.1} parent=1 // pred_check_branch
      %20 = sbr.rel (0) target = $region17
    $region16: #{tpu_custom_call.1} parent=1 // pred_region
      _
    $region17: #{tpu_custom_call.1} parent=1 // pred_fallthru
      _
    // Predicated region
    $region18: #{tpu_custom_call.1} parent=1 // pred_check
      _
    $region19: #{tpu_custom_call.1} parent=1 // pred_check_branch
      %22 = sbr.rel (0) target = $region21
    $region20: #{tpu_custom_call.1} parent=1 // pred_region
      _
    $region21: #{tpu_custom_call.1} parent=1 // pred_fallthru
      _
    // Predicated region
    $region22: #{tpu_custom_call.1} parent=1 // pred_check
      _
    $region23: #{tpu_custom_call.1} parent=1 // pred_check_branch
      %24 = sbr.rel (0) target = $region25
    $region24: #{tpu_custom_call.1} parent=1 // pred_region
      _
    $region25: #{tpu_custom_call.1} parent=1 // pred_fallthru
      _
    // Predicated region
    $region26: #{tpu_custom_call.1} parent=1 // pred_check
      _
    $region27: #{tpu_custom_call.1} parent=1 // pred_check_branch
      %26 = sbr.rel (0) target = $region29
    $region28: #{tpu_custom_call.1} parent=1 // pred_region
      _
    $region29: #{tpu_custom_call.1} parent=1 // pred_fallthru
      _
    %v27 = vld [vmem:[%s0] sm:$0xff]
    %v28 = vld [vmem:[%s0 + $0x8] sm:$0x3]
    %v29 = vld [vmem:[%s1] sm:$0xff]
    %v30 = vld [vmem:[%s1 + $0x8] sm:$0xff]
    %v31 = vld [vmem:[%s1 + $0x10] sm:$0xff]
    %v32 = vld [vmem:[%s1 + $0x18] sm:$0xff]
    %v33 = vld [vmem:[%s1 + $0x20] sm:$0xff]
    %v34 = vld [vmem:[%s1 + $0x28] sm:$0xff]
    %v35 = vld [vmem:[%s1 + $0x30] sm:$0xff]
    %v36 = vld [vmem:[%s1 + $0x38] sm:$0xff]
    %v37 = vld [vmem:[%s2] sm:$0xff]
    %v38 = vld [vmem:[%s2 + $0x8] sm:$0xff]
    %v39 = vld [vmem:[%s2 + $0x10] sm:$0xff]
    %v40 = vld [vmem:[%s2 + $0x18] sm:$0xff]
    %v41 = vld [vmem:[%s2 + $0x20] sm:$0xff]
    %v42 = vld [vmem:[%s2 + $0x28] sm:$0xff]
    %v43 = vld [vmem:[%s2 + $0x30] sm:$0xff]
    %v44 = vld [vmem:[%s2 + $0x38] sm:$0xff]
    %46 = vset.pattern.permute.xlu0 0
    %47 = vperm.xlu0 %46, %v37
    %v48 = vpop.permute.xlu0 %47
    %51 = vset.pattern.permute.xlu0 0
    %52 = vperm.xlu0 %51, %v38
    %v53 = vpop.permute.xlu0 %52
    %56 = vset.pattern.permute.xlu0 0
    %57 = vperm.xlu0 %56, %v39
    %v58 = vpop.permute.xlu0 %57
    %61 = vset.pattern.permute.xlu0 0
    %62 = vperm.xlu0 %61, %v40
    %v63 = vpop.permute.xlu0 %62
    %66 = vset.pattern.permute.xlu0 0
    %67 = vperm.xlu0 %66, %v41
    %v68 = vpop.permute.xlu0 %67
    %71 = vset.pattern.permute.xlu0 0
    %72 = vperm.xlu0 %71, %v42
    %v73 = vpop.permute.xlu0 %72
    %76 = vset.pattern.permute.xlu0 0
    %77 = vperm.xlu0 %76, %v43
    %v78 = vpop.permute.xlu0 %77
    %81 = vset.pattern.permute.xlu0 0
    %82 = vperm.xlu0 %81, %v44
    %v83 = vpop.permute.xlu0 %82
    %vm85 = vcmask 80896
    %v87 = vsel %vm85, %v29, 0
    %v90 = vsel %vm85, %v30, 0
    %v93 = vsel %vm85, %v31, 0
    %v96 = vsel %vm85, %v32, 0
    %v99 = vsel %vm85, %v33, 0
    %v102 = vsel %vm85, %v34, 0
    %v105 = vsel %vm85, %v35, 0
    %v108 = vsel %vm85, %v36, 0
    %vm110 = vcmask 1041408
    %v112 = vsel %vm110, %v28, 0
    %114 = vmatprep.subr.mxu0 0.0
    %115 = vmatpush1.msra.mxu0 %v27
    %116 = vmatprep.subr.mxu0 0.0
    %117 = vmatpush1.msra.mxu0 %v112
    %118 = vmatprep.subr.mxu0 0.0
    %119 = vmatpush1.msra.mxu0 0.0
    %120 = vmatprep.subr.mxu0 0.0
    %121 = vmatpush1.msra.mxu0 0.0
    %122 = vmatprep.subr.mxu0 0.0
    %123 = vmatpush1.msra.mxu0 0.0
    %124 = vmatprep.subr.mxu0 0.0
    %125 = vmatpush1.msra.mxu0 0.0
    %126 = vmatprep.subr.mxu0 0.0
    %127 = vmatpush1.msra.mxu0 0.0
    %128 = vmatprep.subr.mxu0 0.0
    %129 = vmatpush1.msra.mxu0 0.0
    %130 = vmatprep.subr.mxu0 0.0
    %131 = vmatpush1.msra.mxu0 0.0
    %132 = vmatprep.subr.mxu0 0.0
    %133 = vmatpush1.msra.mxu0 0.0
    %134 = vmatprep.subr.mxu0 0.0
    %135 = vmatpush1.msra.mxu0 0.0
    %136 = vmatprep.subr.mxu0 0.0
    %137 = vmatpush1.msra.mxu0 0.0
    %138 = vmatprep.subr.mxu0 0.0
    %139 = vmatpush1.msra.mxu0 0.0
    %140 = vmatprep.subr.mxu0 0.0
    %141 = vmatpush1.msra.mxu0 0.0
    %142 = vmatprep.subr.mxu0 0.0
    %143 = vmatpush1.msra.mxu0 0.0
    %144 = vmatprep.subr.mxu0 0.0
    %145 = vmatpush1.msra.mxu0 0.0
    %146 = vmatprep.subr.mxu0 0.0
    %147 = vmatpush1.msra.mxu0 0.0
    %148 = vmatprep.subr.mxu0 0.0
    %149 = vmatpush1.msra.mxu0 0.0
    %150 = vmatprep.subr.mxu0 0.0
    %151 = vmatpush1.msra.mxu0 0.0
    %152 = vmatprep.subr.mxu0 0.0
    %153 = vmatpush1.msra.mxu0 0.0
    %154 = vmatprep.subr.mxu0 0.0
    %155 = vmatpush1.msra.mxu0 0.0
    %156 = vmatprep.subr.mxu0 0.0
    %157 = vmatpush1.msra.mxu0 0.0
    %158 = vmatprep.subr.mxu0 0.0
    %159 = vmatpush1.msra.mxu0 0.0
    %160 = vmatprep.subr.mxu0 0.0
    %161 = vmatpush1.msra.mxu0 0.0
    %162 = vmatprep.subr.mxu0 0.0
    %163 = vmatpush1.msra.mxu0 0.0
    %164 = vmatprep.subr.mxu0 0.0
    %165 = vmatpush1.msra.mxu0 0.0
    %166 = vmatprep.subr.mxu0 0.0
    %167 = vmatpush1.msra.mxu0 0.0
    %168 = vmatprep.subr.mxu0 0.0
    %169 = vmatpush1.msra.mxu0 0.0
    %170 = vmatprep.subr.mxu0 0.0
    %171 = vmatpush1.msra.mxu0 0.0
    %172 = vmatprep.subr.mxu0 0.0
    %173 = vmatpush1.msra.mxu0 0.0
    %174 = vmatprep.subr.mxu0 0.0
    %175 = vmatpush1.msra.mxu0 0.0
    %176 = vmatprep.subr.mxu0 0.0
    %177 = vmatpush1.msra.mxu0 0.0
    %178 = vmatprep.mubr.f32.mxu0 0.0
    %179 = vmatmul.mubr.f32.gmra.mrb[0].mxu0 %v87
    %v180 = vpop.f32.mrb[0].mxu0
    %v181 = vadd.f32 %v48, %v180
    %v182 = vpop.f32.mrb[0].mxu0
    %183 = vmatprep.mubr.f32.mxu0 0.0
    %184 = vmatmul.mubr.f32.gmra.mrb[0].mxu0 %v90
    %v185 = vpop.f32.mrb[0].mxu0
    %v186 = vadd.f32 %v53, %v185
    %v187 = vpop.f32.mrb[0].mxu0
    %188 = vmatprep.mubr.f32.mxu0 0.0
    %189 = vmatmul.mubr.f32.gmra.mrb[0].mxu0 %v93
    %v190 = vpop.f32.mrb[0].mxu0
    %v191 = vadd.f32 %v58, %v190
    %v192 = vpop.f32.mrb[0].mxu0
    %193 = vmatprep.mubr.f32.mxu0 0.0
    %194 = vmatmul.mubr.f32.gmra.mrb[0].mxu0 %v96
    %v195 = vpop.f32.mrb[0].mxu0
    %v196 = vadd.f32 %v63, %v195
    %v197 = vpop.f32.mrb[0].mxu0
    %198 = vmatprep.mubr.f32.mxu0 0.0
    %199 = vmatmul.mubr.f32.gmra.mrb[0].mxu0 %v99
    %v200 = vpop.f32.mrb[0].mxu0
    %v201 = vadd.f32 %v68, %v200
    %v202 = vpop.f32.mrb[0].mxu0
    %203 = vmatprep.mubr.f32.mxu0 0.0
    %204 = vmatmul.mubr.f32.gmra.mrb[0].mxu0 %v102
    %v205 = vpop.f32.mrb[0].mxu0
    %v206 = vadd.f32 %v73, %v205
    %v207 = vpop.f32.mrb[0].mxu0
    %208 = vmatprep.mubr.f32.mxu0 0.0
    %209 = vmatmul.mubr.f32.gmra.mrb[0].mxu0 %v105
    %v210 = vpop.f32.mrb[0].mxu0
    %v211 = vadd.f32 %v78, %v210
    %v212 = vpop.f32.mrb[0].mxu0
    %213 = vmatprep.mubr.f32.mxu0 0.0
    %214 = vmatmul.mubr.f32.gmra.mrb[0].mxu0 %v108
    %v215 = vpop.f32.mrb[0].mxu0
    %v216 = vadd.f32 %v83, %v215
    %v217 = vpop.f32.mrb[0].mxu0
    %218 = vdwg.mxu0
    %v219 = vtanh.pop %v181
    %v220 = vtanh.pop %v186
    %v221 = vtanh.pop %v191
    %v222 = vtanh.pop %v196
    %v223 = vtanh.pop %v201
    %v224 = vtanh.pop %v206
    %v225 = vtanh.pop %v211
    %v226 = vtanh.pop %v216
    %v227 = vld [vmem:[%s3] sm:$0xff]
    %v228 = vld [vmem:[%s3 + $0x8] sm:$0xff]
    %v229 = vld [vmem:[%s3 + $0x10] sm:$0xff]
    %v230 = vld [vmem:[%s3 + $0x18] sm:$0xff]
    %v231 = vld [vmem:[%s3 + $0x20] sm:$0xff]
    %v232 = vld [vmem:[%s3 + $0x28] sm:$0xff]
    %v233 = vld [vmem:[%s3 + $0x30] sm:$0xff]
    %v234 = vld [vmem:[%s3 + $0x38] sm:$0xff]
    %v235 = vld [vmem:[%s4] sm:$0xff]
    %v236 = vld [vmem:[%s4 + $0x8] sm:$0xff]
    %v237 = vld [vmem:[%s4 + $0x10] sm:$0xff]
    %v238 = vld [vmem:[%s4 + $0x18] sm:$0xff]
    %v239 = vld [vmem:[%s4 + $0x20] sm:$0xff]
    %v240 = vld [vmem:[%s4 + $0x28] sm:$0xff]
    %v241 = vld [vmem:[%s4 + $0x30] sm:$0xff]
    %v242 = vld [vmem:[%s4 + $0x38] sm:$0xff]
    %244 = vset.pattern.permute.xlu0 0
    %245 = vperm.xlu0 %244, %v235
    %v246 = vpop.permute.xlu0 %245
    %249 = vset.pattern.permute.xlu0 0
    %250 = vperm.xlu0 %249, %v236
    %v251 = vpop.permute.xlu0 %250
    %254 = vset.pattern.permute.xlu0 0
    %255 = vperm.xlu0 %254, %v237
    %v256 = vpop.permute.xlu0 %255
    %259 = vset.pattern.permute.xlu0 0
    %260 = vperm.xlu0 %259, %v238
    %v261 = vpop.permute.xlu0 %260
    %264 = vset.pattern.permute.xlu0 0
    %265 = vperm.xlu0 %264, %v239
    %v266 = vpop.permute.xlu0 %265
    %269 = vset.pattern.permute.xlu0 0
    %270 = vperm.xlu0 %269, %v240
    %v271 = vpop.permute.xlu0 %270
    %274 = vset.pattern.permute.xlu0 0
    %275 = vperm.xlu0 %274, %v241
    %v276 = vpop.permute.xlu0 %275
    %279 = vset.pattern.permute.xlu0 0
    %280 = vperm.xlu0 %279, %v242
    %v281 = vpop.permute.xlu0 %280
    %vm283 = vcmask 523264
    %v285 = vsel %vm283, %v227, 0
    %v288 = vsel %vm283, %v228, 0
    %v291 = vsel %vm283, %v229, 0
    %v294 = vsel %vm283, %v230, 0
    %v297 = vsel %vm283, %v231, 0
    %v300 = vsel %vm283, %v232, 0
    %v303 = vsel %vm283, %v233, 0
    %v306 = vsel %vm283, %v234, 0
    %308 = vmatprep.subr.mxu0 0.0
    %309 = vmatpush1.msra.mxu0 %v219
    %310 = vmatprep.subr.mxu0 0.0
    %311 = vmatpush1.msra.mxu0 %v220
    %312 = vmatprep.subr.mxu0 0.0
    %313 = vmatpush1.msra.mxu0 %v221
    %314 = vmatprep.subr.mxu0 0.0
    %315 = vmatpush1.msra.mxu0 %v222
    %316 = vmatprep.subr.mxu0 0.0
    %317 = vmatpush1.msra.mxu0 %v223
    %318 = vmatprep.subr.mxu0 0.0
    %319 = vmatpush1.msra.mxu0 %v224
    %320 = vmatprep.subr.mxu0 0.0
    %321 = vmatpush1.msra.mxu0 %v225
    %322 = vmatprep.subr.mxu0 0.0
    %323 = vmatpush1.msra.mxu0 %v226
    %324 = vmatprep.subr.mxu0 0.0
    %325 = vmatpush1.msra.mxu0 0.0
    %326 = vmatprep.subr.mxu0 0.0
    %327 = vmatpush1.msra.mxu0 0.0
    %328 = vmatprep.subr.mxu0 0.0
    %329 = vmatpush1.msra.mxu0 0.0
    %330 = vmatprep.subr.mxu0 0.0
    %331 = vmatpush1.msra.mxu0 0.0
    %332 = vmatprep.subr.mxu0 0.0
    %333 = vmatpush1.msra.mxu0 0.0
    %334 = vmatprep.subr.mxu0 0.0
    %335 = vmatpush1.msra.mxu0 0.0
    %336 = vmatprep.subr.mxu0 0.0
    %337 = vmatpush1.msra.mxu0 0.0
    %338 = vmatprep.subr.mxu0 0.0
    %339 = vmatpush1.msra.mxu0 0.0
    %340 = vmatprep.subr.mxu0 0.0
    %341 = vmatpush1.msra.mxu0 0.0
    %342 = vmatprep.subr.mxu0 0.0
    %343 = vmatpush1.msra.mxu0 0.0
    %344 = vmatprep.subr.mxu0 0.0
    %345 = vmatpush1.msra.mxu0 0.0
    %346 = vmatprep.subr.mxu0 0.0
    %347 = vmatpush1.msra.mxu0 0.0
    %348 = vmatprep.subr.mxu0 0.0
    %349 = vmatpush1.msra.mxu0 0.0
    %350 = vmatprep.subr.mxu0 0.0
    %351 = vmatpush1.msra.mxu0 0.0
    %352 = vmatprep.subr.mxu0 0.0
    %353 = vmatpush1.msra.mxu0 0.0
    %354 = vmatprep.subr.mxu0 0.0
    %355 = vmatpush1.msra.mxu0 0.0
    %356 = vmatprep.subr.mxu0 0.0
    %357 = vmatpush1.msra.mxu0 0.0
    %358 = vmatprep.subr.mxu0 0.0
    %359 = vmatpush1.msra.mxu0 0.0
    %360 = vmatprep.subr.mxu0 0.0
    %361 = vmatpush1.msra.mxu0 0.0
    %362 = vmatprep.subr.mxu0 0.0
    %363 = vmatpush1.msra.mxu0 0.0
    %364 = vmatprep.subr.mxu0 0.0
    %365 = vmatpush1.msra.mxu0 0.0
    %366 = vmatprep.subr.mxu0 0.0
    %367 = vmatpush1.msra.mxu0 0.0
    %368 = vmatprep.subr.mxu0 0.0
    %369 = vmatpush1.msra.mxu0 0.0
    %370 = vmatprep.subr.mxu0 0.0
    %371 = vmatpush1.msra.mxu0 0.0
    %372 = vmatprep.mubr.f32.mxu0 0.0
    %373 = vmatmul.mubr.f32.gmra.mrb[0].mxu0 %v285
    %v374 = vpop.f32.mrb[0].mxu0
    %v375 = vadd.f32 %v246, %v374
    %v376 = vpop.f32.mrb[0].mxu0
    %377 = vmatprep.mubr.f32.mxu0 0.0
    %378 = vmatmul.mubr.f32.gmra.mrb[0].mxu0 %v288
    %v379 = vpop.f32.mrb[0].mxu0
    %v380 = vadd.f32 %v251, %v379
    %v381 = vpop.f32.mrb[0].mxu0
    %382 = vmatprep.mubr.f32.mxu0 0.0
    %383 = vmatmul.mubr.f32.gmra.mrb[0].mxu0 %v291
    %v384 = vpop.f32.mrb[0].mxu0
    %v385 = vadd.f32 %v256, %v384
    %v386 = vpop.f32.mrb[0].mxu0
    %387 = vmatprep.mubr.f32.mxu0 0.0
    %388 = vmatmul.mubr.f32.gmra.mrb[0].mxu0 %v294
    %v389 = vpop.f32.mrb[0].mxu0
    %v390 = vadd.f32 %v261, %v389
    %v391 = vpop.f32.mrb[0].mxu0
    %392 = vmatprep.mubr.f32.mxu0 0.0
    %393 = vmatmul.mubr.f32.gmra.mrb[0].mxu0 %v297
    %v394 = vpop.f32.mrb[0].mxu0
    %v395 = vadd.f32 %v266, %v394
    %v396 = vpop.f32.mrb[0].mxu0
    %397 = vmatprep.mubr.f32.mxu0 0.0
    %398 = vmatmul.mubr.f32.gmra.mrb[0].mxu0 %v300
    %v399 = vpop.f32.mrb[0].mxu0
    %v400 = vadd.f32 %v271, %v399
    %v401 = vpop.f32.mrb[0].mxu0
    %402 = vmatprep.mubr.f32.mxu0 0.0
    %403 = vmatmul.mubr.f32.gmra.mrb[0].mxu0 %v303
    %v404 = vpop.f32.mrb[0].mxu0
    %v405 = vadd.f32 %v276, %v404
    %v406 = vpop.f32.mrb[0].mxu0
    %407 = vmatprep.mubr.f32.mxu0 0.0
    %408 = vmatmul.mubr.f32.gmra.mrb[0].mxu0 %v306
    %v409 = vpop.f32.mrb[0].mxu0
    %v410 = vadd.f32 %v281, %v409
    %v411 = vpop.f32.mrb[0].mxu0
    %412 = vdwg.mxu0
    %v413 = vtanh.pop %v375
    %v414 = vtanh.pop %v380
    %v415 = vtanh.pop %v385
    %v416 = vtanh.pop %v390
    %v417 = vtanh.pop %v395
    %v418 = vtanh.pop %v400
    %v419 = vtanh.pop %v405
    %v420 = vtanh.pop %v410
    %v421 = vld [vmem:[%s5] sm:$0x3]
    %v422 = vld [vmem:[%s6] sm:$0x3]
    %424 = vset.pattern.permute.xlu0 0
    %425 = vperm.xlu0 %424, %v422
    %v426 = vpop.permute.xlu0 %425
    %v429 = vsel %vm283, %v421, 0
    %431 = vmatprep.subr.mxu0 0.0
    %432 = vmatpush1.msra.mxu0 %v413
    %433 = vmatprep.subr.mxu0 0.0
    %434 = vmatpush1.msra.mxu0 %v414
    %435 = vmatprep.subr.mxu0 0.0
    %436 = vmatpush1.msra.mxu0 %v415
    %437 = vmatprep.subr.mxu0 0.0
    %438 = vmatpush1.msra.mxu0 %v416
    %439 = vmatprep.subr.mxu0 0.0
    %440 = vmatpush1.msra.mxu0 %v417
    %441 = vmatprep.subr.mxu0 0.0
    %442 = vmatpush1.msra.mxu0 %v418
    %443 = vmatprep.subr.mxu0 0.0
    %444 = vmatpush1.msra.mxu0 %v419
    %445 = vmatprep.subr.mxu0 0.0
    %446 = vmatpush1.msra.mxu0 %v420
    %447 = vmatprep.subr.mxu0 0.0
    %448 = vmatpush1.msra.mxu0 0.0
    %449 = vmatprep.subr.mxu0 0.0
    %450 = vmatpush1.msra.mxu0 0.0
    %451 = vmatprep.subr.mxu0 0.0
    %452 = vmatpush1.msra.mxu0 0.0
    %453 = vmatprep.subr.mxu0 0.0
    %454 = vmatpush1.msra.mxu0 0.0
    %455 = vmatprep.subr.mxu0 0.0
    %456 = vmatpush1.msra.mxu0 0.0
    %457 = vmatprep.subr.mxu0 0.0
    %458 = vmatpush1.msra.mxu0 0.0
    %459 = vmatprep.subr.mxu0 0.0
    %460 = vmatpush1.msra.mxu0 0.0
    %461 = vmatprep.subr.mxu0 0.0
    %462 = vmatpush1.msra.mxu0 0.0
    %463 = vmatprep.subr.mxu0 0.0
    %464 = vmatpush1.msra.mxu0 0.0
    %465 = vmatprep.subr.mxu0 0.0
    %466 = vmatpush1.msra.mxu0 0.0
    %467 = vmatprep.subr.mxu0 0.0
    %468 = vmatpush1.msra.mxu0 0.0
    %469 = vmatprep.subr.mxu0 0.0
    %470 = vmatpush1.msra.mxu0 0.0
    %471 = vmatprep.subr.mxu0 0.0
    %472 = vmatpush1.msra.mxu0 0.0
    %473 = vmatprep.subr.mxu0 0.0
    %474 = vmatpush1.msra.mxu0 0.0
    %475 = vmatprep.subr.mxu0 0.0
    %476 = vmatpush1.msra.mxu0 0.0
    %477 = vmatprep.subr.mxu0 0.0
    %478 = vmatpush1.msra.mxu0 0.0
    %479 = vmatprep.subr.mxu0 0.0
    %480 = vmatpush1.msra.mxu0 0.0
    %481 = vmatprep.subr.mxu0 0.0
    %482 = vmatpush1.msra.mxu0 0.0
    %483 = vmatprep.subr.mxu0 0.0
    %484 = vmatpush1.msra.mxu0 0.0
    %485 = vmatprep.subr.mxu0 0.0
    %486 = vmatpush1.msra.mxu0 0.0
    %487 = vmatprep.subr.mxu0 0.0
    %488 = vmatpush1.msra.mxu0 0.0
    %489 = vmatprep.subr.mxu0 0.0
    %490 = vmatpush1.msra.mxu0 0.0
    %491 = vmatprep.subr.mxu0 0.0
    %492 = vmatpush1.msra.mxu0 0.0
    %493 = vmatprep.subr.mxu0 0.0
    %494 = vmatpush1.msra.mxu0 0.0
    %495 = vmatprep.mubr.f32.mxu0 0.0
    %496 = vmatmul.mubr.f32.gmra.mrb[0].mxu0 %v429
    %v497 = vpop.f32.mrb[0].mxu0
    %v498 = vadd.f32 %v426, %v497
    %v499 = vpop.f32.mrb[0].mxu0
    %500 = vdwg.mxu0
    %v501 = vxor.u32 %v498, 2147483648
    %v502 = vmul.f32 %v501, 1.442695
    %v503 = vpow.pop %v502
    %v504 = vadd.f32 %v503, 1.0
    %v505 = vrcp.pop %v504
    %v506 = vmul.f32 1.0, %v505
    %v507 = vmul.f32 %v27, %v506
    %vm508 = vcmask 58368
    %v509 = vsel %vm508, %v507, 0.0
    %v510 = vrot.slane %v509, 4
    %v511 = vadd.f32 %v509, %v510
    %v512 = vrot.slane %v511, 2
    %v513 = vadd.f32 %v511, %v512
    %v514 = vrot.slane %v513, 1
    %v515 = vadd.f32 %v513, %v514
    %vm516 = vcmask 57344
    %517 = vst.msk [vmem:[#allocation2] sm:$0x1] %vm516, %v515
    // Predicated region
    $region30: #{tpu_custom_call.1} parent=1 // pred_check
      _
    $region31: #{tpu_custom_call.1} parent=1 // pred_check_branch
      %519 = sbr.rel (0) target = $region33
    $region32: #{tpu_custom_call.1} parent=1 // pred_region
      %s521 = ssub.s32 16, 16
      %522 = vsyncadd [#allocation3], %s521
      %s524 = sshll.u32 [#allocation2], 4
      %s525 = int_to_ptr.vmem [resolvable:$true] %s524
      %527 = dma.vmem_to_hbm [thread:$0]  %s525, 16, %s7, [#allocation3]
    $region33: #{tpu_custom_call.1} parent=1 // pred_fallthru
      _
    // Predicated region
    $region34: #{tpu_custom_call.1} parent=1 // pred_check
      _
    $region35: #{tpu_custom_call.1} parent=1 // pred_check_branch
      %529 = sbr.rel (0) target = $region37
    $region36: #{tpu_custom_call.1} parent=1 // pred_region
      %530 = dma.done [#allocation3], 16
    $region37: #{tpu_custom_call.1} parent=1 // pred_fallthru
      _
    %531 = vsyncpa [#allocation3], 1

</llo_original>
